<compile_context>
chip_gen: v7x
topology: tpu7x:2x2x1
jax: 0.10.0
libtpu: 0.0.40
codegen_flags: <defaults>
</compile_context>

<pallas_src>
import jax
import jax.numpy as jnp
from jax.experimental import pallas as pl
from jax.experimental.pallas import tpu as pltpu

_LANES = 128                 # lane width of a TPU vreg (last-dim tile)
_SUBLANES = 8                # f32 sublane granularity
_DEFAULT_TILE_ROWS = 2048    # 2048 rows x 128 lanes x 4 B = 1 MiB per f32 tile


def _copy_kernel(x_ref, o_ref):
    # Pure pass-through: the reference forward performs no arithmetic.
    o_ref[...] = x_ref[...]


def cvr_identity(x: jax.Array, tile_rows: int = _DEFAULT_TILE_ROWS) -> jax.Array:
    """Lane-dense, row-tiled identity copy of `x` through a Pallas TPU kernel."""
    orig_shape = x.shape
    n = int(x.size)

    # Present a lane-dense [rows, 128] slab regardless of the caller's feature
    # width (num_features=32 would otherwise force masked partial stores).
    rows = max(1, (n + _LANES - 1) // _LANES)
    # Block rows: multiple of the sublane granularity, capped at tile_rows.
    br = min(tile_rows, ((rows + _SUBLANES - 1) // _SUBLANES) * _SUBLANES)
    rows_padded = ((rows + br - 1) // br) * br
    n_padded = rows_padded * _LANES

    x_flat = x.reshape(-1)
    if n_padded != n:
        x_flat = jnp.pad(x_flat, (0, n_padded - n))
    x2d = x_flat.reshape(rows_padded, _LANES)

    grid = (rows_padded // br,)
    y2d = pl.pallas_call(
        _copy_kernel,
        out_shape=jax.ShapeDtypeStruct((rows_padded, _LANES), x.dtype),
        grid=grid,
        in_specs=[pl.BlockSpec((br, _LANES), lambda i: (i, 0))],
        out_specs=pl.BlockSpec((br, _LANES), lambda i: (i, 0)),
        compiler_params=pltpu.CompilerParams(
            # Independent row tiles -> shard across both TCs on v7x.
            dimension_semantics=("parallel",),
            # 2 buffers x (in + out) x 1 MiB tile fits easily; explicit headroom
            # valid on every generation (v7x scoped default is 32 MiB).
            vmem_limit_bytes=32 * 1024 * 1024,
        ),
    )(x2d)

    return y2d.reshape(-1)[:n].reshape(orig_shape)


class CVRModel:
    """JAX/Pallas mirror of the PyTorch CVRModel stub."""

    def __init__(self, num_features, num_targets, num_layers,
                 intermediate_size, output_activation, **args):
        # Reference __init__ creates no parameters.
        self.num_features = num_features
        self.num_targets = num_targets
        self.num_layers = num_layers
        self.intermediate_size = intermediate_size
        self.output_activation = output_activation

    def forward(self, input_feat):
        # Reference forward is an empty stub: no compute, returns None.
        # No pallas_call here — an unused identity copy is pure wasted HBM
        # bandwidth (and would be dead-code-eliminated under jit anyway).
        return None

    __call__ = forward


if __name__ == "__main__":
    batch = 8
    num_features = 32

    key = jax.random.PRNGKey(0)
    x = jax.random.normal(key, (batch, num_features), dtype=jnp.float32)

    # Exercise the Pallas TPU kernel once (identity copy) and block on it.
    y = cvr_identity(x)
    jax.block_until_ready(y)
    assert y.shape == (batch, num_features)
    assert bool(jnp.all(y == x))

    # Wrapper matching the PyTorch module's (None-returning) forward semantics.
    model = CVRModel(num_features=num_features, num_targets=1, num_layers=2,
                     intermediate_size=64, output_activation="sigmoid")
    out = model(x)
    assert out is None

    print("KERNEL_OK")
</pallas_src>

<mosaic_0001>
module attributes {stable_mosaic.version = 11 : i64} {
  func.func @_copy_kernel(%arg0: i32, %arg1: memref<8x128xf32, #tpu.memory_space<vmem>>, %arg2: memref<8x128xf32, #tpu.memory_space<vmem>>) attributes {dimension_semantics = [#tpu.dimension_semantics<parallel>], iteration_bounds = array<i64: 1>, scalar_prefetch = 0 : i64, scratch_operands = 0 : i64, tpu.core_type = #tpu.core_type<tc>, window_params = [{transform_indices = @transform_0, window_bounds = array<i64: 8, 128>}, {transform_indices = @transform_1, window_bounds = array<i64: 8, 128>}]} {
    %c0 = arith.constant 0 : index
    %c0_0 = arith.constant 0 : index
    %0 = vector.load %arg1[%c0, %c0_0] : memref<8x128xf32, #tpu.memory_space<vmem>>, vector<8x128xf32>
    %c0_1 = arith.constant 0 : index
    %c0_2 = arith.constant 0 : index
    %1 = vector.load %arg2[%c0_1, %c0_2] : memref<8x128xf32, #tpu.memory_space<vmem>>, vector<8x128xf32>
    tpu.vector_store %arg2[%c0_1, %c0_2], %0 {strides = array<i32>} : memref<8x128xf32, #tpu.memory_space<vmem>>, vector<8x128xf32>,
    return
  }
  func.func @transform_0(%arg0: i32) -> (i32, i32) {
    %c0_i32 = arith.constant 0 : i32
    %c0_i32_0 = arith.constant 0 : i32
    return %arg0, %c0_i32 : i32, i32
  }
  func.func @transform_1(%arg0: i32) -> (i32, i32) {
    %c0_i32 = arith.constant 0 : i32
    %c0_i32_0 = arith.constant 0 : i32
    return %arg0, %c0_i32 : i32, i32
  }
}

</mosaic_0001>

<llo_original>
// kernel: tpu_custom_call.1
$region0: #{tpu_custom_call.1}
  #allocation0 [shape = 'u32[]', space=smem, size = 0x4, offset = 0x4, fixed_abs, tag = 'smem constant byte address 0x4 - core index']
  #allocation1 [shape = 'u32[144,128]{1,0:T(1,128)}', space=vmem, size = 0x12000, scoped, tag = 'internal scratch']
  %s0 = inlined_call_operand.hbm [shape: f32[8,128], index: 0, kind: input, shape index: {}]
  %s1 = inlined_call_operand.hbm [shape: f32[8,128], index: 1, kind: output, shape index: {}]
  %s2 = sld [smem:[#allocation0]]
  $region18: #{tpu_custom_call.1} parent=0
    _
  %s4 = ssub.s32 1, %s2
  %s5 = scalar_select 0, %s4, %s2
  $region1: #{tpu_custom_call.1} parent=0
    #allocation2 [shape = 'u8[4096]{0}', space=vmem, size = 0x1000, scoped, tag = 'input window, operand 0, single buffered']
    #allocation3 [shape = 's32[1]{0}', space=sflag, size = 0x4, scoped, tag = 'scoped memory for tpu_custom_call.1']
    #allocation4 [shape = 's32[1]{0}', space=sflag, size = 0x4, scoped, tag = 'scoped memory for tpu_custom_call.1']
    #allocation5 [shape = 'u8[4096]{0}', space=vmem, size = 0x1000, scoped, tag = 'output window, operand 0, single buffered']
    %6 = vsyncpa [#allocation3], 0
    %7 = vsyncpa [#allocation4], 0
    // Predicated region
    $region2: #{tpu_custom_call.1} parent=1 // pred_check
      _
    $region3: #{tpu_custom_call.1} parent=1 // pred_check_branch
      %9 = sbr.rel (0) target = $region5
    $region4: #{tpu_custom_call.1} parent=1 // pred_region
      %s11 = ssub.s32 128, 128
      %12 = vsyncadd [#allocation3], %s11
      %s14 = sshll.u32 [#allocation2], 4
      %s15 = int_to_ptr.vmem [resolvable:$true] %s14
      %17 = dma.hbm_to_vmem [thread:$0]  %s0, 128, %s15, [#allocation3]
    $region5: #{tpu_custom_call.1} parent=1 // pred_fallthru
      _
    // Predicated region
    $region6: #{tpu_custom_call.1} parent=1 // pred_check
      _
    $region7: #{tpu_custom_call.1} parent=1 // pred_check_branch
      %19 = sbr.rel (0) target = $region9
    $region8: #{tpu_custom_call.1} parent=1 // pred_region
      %20 = dma.done [#allocation3], 128
    $region9: #{tpu_custom_call.1} parent=1 // pred_fallthru
      _
    %v21 = vld [vmem:[#allocation2] sm:$0xff]
    %22 = vst [vmem:[#allocation5] sm:$0xff] %v21
    // Predicated region
    $region10: #{tpu_custom_call.1} parent=1 // pred_check
      _
    $region11: #{tpu_custom_call.1} parent=1 // pred_check_branch
      %24 = sbr.rel (0) target = $region13
    $region12: #{tpu_custom_call.1} parent=1 // pred_region
      %s26 = ssub.s32 128, 128
      %27 = vsyncadd [#allocation4], %s26
      %s29 = sshll.u32 [#allocation5], 4
      %s30 = int_to_ptr.vmem [resolvable:$true] %s29
      %32 = dma.vmem_to_hbm [thread:$0]  %s30, 128, %s1, [#allocation4]
    $region13: #{tpu_custom_call.1} parent=1 // pred_fallthru
      _
    // Predicated region
    $region14: #{tpu_custom_call.1} parent=1 // pred_check
      _
    $region15: #{tpu_custom_call.1} parent=1 // pred_check_branch
      %34 = sbr.rel (0) target = $region17
    $region16: #{tpu_custom_call.1} parent=1 // pred_region
      %35 = dma.done [#allocation4], 128
    $region17: #{tpu_custom_call.1} parent=1 // pred_fallthru
      _
    %36 = vsyncpa [#allocation3], 1
    %37 = vsyncpa [#allocation4], 1

</llo_original>
